<compile_context>
chip_gen: v6e
topology: v6e:2x2x1
jax: 0.10.0
libtpu: 0.0.40
codegen_flags: <defaults>
</compile_context>

<pallas_src>
import jax
import jax.numpy as jnp
from jax.experimental import pallas as pl
from jax.experimental.pallas import tpu as pltpu


def darknet_block_kernel(x_ref, w1_ref, b1_ref, w2_ref, b2_ref, o_ref):
    # x_ref:  (C, T_HW)   input dtype (one batch element, one spatial tile)
    # w1_ref: (C//2, C)   bf16  conv1 weight with BN1 folded in
    # b1_ref: (C//2, 1)   f32
    # w2_ref: (C, C//2)   bf16  conv2 weight with BN2 folded in
    # b2_ref: (C, 1)      f32
    # o_ref:  (C, T_HW)   input dtype
    xb = x_ref[...].astype(jnp.bfloat16)

    # Conv1 (1x1, BN folded) + SiLU.  bf16 x bf16 -> f32 accumulate (fast MXU path).
    h = jnp.dot(w1_ref[...], xb, preferred_element_type=jnp.float32) + b1_ref[...]
    h = h * jax.nn.sigmoid(h)          # sigmoid runs on the EUP slot (free under DMA)

    # Conv2 (1x1, BN folded) + SiLU.
    y = jnp.dot(w2_ref[...], h.astype(jnp.bfloat16),
                preferred_element_type=jnp.float32) + b2_ref[...]
    y = y * jax.nn.sigmoid(y)

    # Residual add; re-read x from VMEM (cheap vld, keeps vreg pressure low).
    o_ref[...] = (x_ref[...].astype(jnp.float32) + y).astype(o_ref.dtype)


def _fold_conv_bn(conv_w, conv_b, gamma, beta, mean, var, eps):
    """Fold eval-mode BatchNorm into a 1x1 conv.  conv_w: (Cout, Cin, 1, 1)."""
    w = conv_w.reshape(conv_w.shape[0], -1).astype(jnp.float32)      # (Cout, Cin)
    scale = gamma.astype(jnp.float32) / jnp.sqrt(var.astype(jnp.float32) + eps)
    w_f = w * scale[:, None]
    b_f = scale * (conv_b.astype(jnp.float32) - mean.astype(jnp.float32)) \
        + beta.astype(jnp.float32)
    return w_f, b_f


def darknet_block(x, params, *, eps=1e-5, t_hw_override=None):
    """x: (B, C, H, W). params: PyTorch-layout conv1/2 + BN1/2 parameters."""
    b, c, hh, ww = x.shape
    ch = c // 2
    hw = hh * ww

    w1, b1 = _fold_conv_bn(params["conv1_w"], params["conv1_b"],
                           params["bn1_gamma"], params["bn1_beta"],
                           params["bn1_mean"], params["bn1_var"], eps)
    w2, b2 = _fold_conv_bn(params["conv2_w"], params["conv2_b"],
                           params["bn2_gamma"], params["bn2_beta"],
                           params["bn2_mean"], params["bn2_var"], eps)
    w1 = w1.astype(jnp.bfloat16)                                     # (C//2, C)
    w2 = w2.astype(jnp.bfloat16)                                     # (C, C//2)
    b1 = b1[:, None]                                                 # (C//2, 1) f32
    b2 = b2[:, None]                                                 # (C, 1)    f32

    # Free (contiguous) view — no extra HBM pass, no pad, no dtype cast.
    x_flat = x.reshape(b, c, hw)

    # ---- Adaptive lane-dense spatial tile --------------------------------
    itemsize = x.dtype.itemsize
    target_block_bytes = 2 * 1024 * 1024            # ~2 MiB x block per grid step
    t = (target_block_bytes // (c * itemsize)) // 128 * 128
    t = int(max(512, min(8192, t)))
    if t_hw_override is not None:
        t_hw = int(t_hw_override)
    elif hw <= t:
        t_hw = hw                    # single full-width block (full dims always legal)
    else:
        t_hw = t                     # multiple of 128; ragged last block is masked
    # Megacore: with B == 1 make sure there are >= 2 grid steps to shard.
    if t_hw_override is None and b == 1 and hw > 128 and pl.cdiv(hw, t_hw) < 2:
        t_hw = max(128, (hw // 2) // 128 * 128)
    n_spatial = pl.cdiv(hw, t_hw)

    # ---- Explicit VMEM budget (double-buffered x/out, single-buffered w) --
    x_blk = c * t_hw * itemsize
    w_bytes = 2 * c * ch * 2                         # w1 + w2 (bf16)
    interm = (ch + 2 * c) * t_hw * 4                 # f32 temporaries (h, y, x)
    est = 4 * x_blk + 2 * w_bytes + interm
    vmem_limit = int(min(64 * 1024 * 1024, max(32 * 1024 * 1024, 2 * est)))

    def run(single_buffer_weights):
        if single_buffer_weights:
            # Constant blocks: nothing to prefetch -> single buffer saves VMEM.
            const = lambda shape: pl.BlockSpec(shape, lambda bi, si: (0, 0),
                                               pipeline_mode=pl.Buffered(1))
        else:
            const = lambda shape: pl.BlockSpec(shape, lambda bi, si: (0, 0))
        return pl.pallas_call(
            darknet_block_kernel,
            out_shape=jax.ShapeDtypeStruct((b, c, hw), x.dtype),
            grid=(b, n_spatial),
            in_specs=[
                pl.BlockSpec((None, c, t_hw), lambda bi, si: (bi, 0, si)),
                const((ch, c)),
                const((ch, 1)),
                const((c, ch)),
                const((c, 1)),
            ],
            out_specs=pl.BlockSpec((None, c, t_hw), lambda bi, si: (bi, 0, si)),
            compiler_params=pltpu.CompilerParams(
                dimension_semantics=("parallel", "parallel"),
                vmem_limit_bytes=vmem_limit,
            ),
        )(x_flat, w1, b1, w2, b2)

    try:
        out_flat = run(True)
    except Exception:
        # Feature-guard: fall back to default (double) buffering of the
        # constant weight blocks if pipeline_mode=Buffered(1) is unsupported.
        out_flat = run(False)

    return out_flat.reshape(b, c, hh, ww)


def _reference(x, p, eps=1e-5):
    """Pure-JAX reference of the PyTorch forward (eval-mode BN), f32."""
    def conv1x1(inp, w, bias):
        w2d = w.reshape(w.shape[0], -1)
        out = jnp.einsum("oc,bchw->bohw", w2d, inp,
                         precision=jax.lax.Precision.HIGHEST)
        return out + bias[None, :, None, None]

    def bn(inp, gamma, beta, mean, var):
        inv = gamma / jnp.sqrt(var + eps)
        return (inp - mean[None, :, None, None]) * inv[None, :, None, None] \
            + beta[None, :, None, None]

    def silu(v):
        return v * jax.nn.sigmoid(v)

    h = silu(bn(conv1x1(x, p["conv1_w"], p["conv1_b"]),
                p["bn1_gamma"], p["bn1_beta"], p["bn1_mean"], p["bn1_var"]))
    y = silu(bn(conv1x1(h, p["conv2_w"], p["conv2_b"]),
                p["bn2_gamma"], p["bn2_beta"], p["bn2_mean"], p["bn2_var"]))
    return x + y


if __name__ == "__main__":
    key = jax.random.PRNGKey(0)
    ks = jax.random.split(key, 14)

    B, C, H, W = 2, 16, 16, 16
    CH = C // 2

    x = jax.random.normal(ks[0], (B, C, H, W), dtype=jnp.float32)
    params = dict(
        conv1_w=jax.random.normal(ks[1], (CH, C, 1, 1), jnp.float32) * 0.3,
        conv1_b=jax.random.normal(ks[2], (CH,), jnp.float32) * 0.1,
        bn1_gamma=1.0 + 0.1 * jax.random.normal(ks[3], (CH,), jnp.float32),
        bn1_beta=0.1 * jax.random.normal(ks[4], (CH,), jnp.float32),
        bn1_mean=0.1 * jax.random.normal(ks[5], (CH,), jnp.float32),
        bn1_var=jax.random.uniform(ks[6], (CH,), jnp.float32, 0.5, 1.5),
        conv2_w=jax.random.normal(ks[7], (C, CH, 1, 1), jnp.float32) * 0.3,
        conv2_b=jax.random.normal(ks[8], (C,), jnp.float32) * 0.1,
        bn2_gamma=1.0 + 0.1 * jax.random.normal(ks[9], (C,), jnp.float32),
        bn2_beta=0.1 * jax.random.normal(ks[10], (C,), jnp.float32),
        bn2_mean=0.1 * jax.random.normal(ks[11], (C,), jnp.float32),
        bn2_var=jax.random.uniform(ks[12], (C,), jnp.float32, 0.5, 1.5),
    )

    # Main check (even spatial size, single full-width tile per batch element).
    out = jax.block_until_ready(darknet_block(x, params))
    ref = _reference(x, params)
    assert out.shape == (B, C, H, W)
    assert out.dtype == x.dtype
    # bf16 matmul inputs vs f32 HIGHEST reference -> loosened tolerance.
    assert jnp.allclose(out, ref, atol=5e-2, rtol=5e-2), "mismatch vs reference"

    # Ragged-block check: 13x13 -> H*W = 169 with forced 128-wide tiles
    # (exercises the masked last block + B == 1 path).
    x2 = jax.random.normal(ks[13], (1, C, 13, 13), dtype=jnp.float32)
    out2 = jax.block_until_ready(darknet_block(x2, params, t_hw_override=128))
    ref2 = _reference(x2, params)
    assert out2.shape == (1, C, 13, 13)
    assert jnp.allclose(out2, ref2, atol=5e-2, rtol=5e-2), "mismatch (ragged tile)"

    print("KERNEL_OK")
</pallas_src>

<mosaic_0001>
module attributes {stable_mosaic.version = 11 : i64} {
  func.func @darknet_block_kernel(%arg0: i32, %arg1: i32, %arg2: memref<1x16x256xf32, #tpu.memory_space<vmem>>, %arg3: memref<8x16xbf16, #tpu.memory_space<vmem>>, %arg4: memref<8x1xf32, #tpu.memory_space<vmem>>, %arg5: memref<16x8xbf16, #tpu.memory_space<vmem>>, %arg6: memref<16x1xf32, #tpu.memory_space<vmem>>, %arg7: memref<1x16x256xf32, #tpu.memory_space<vmem>>) attributes {dimension_semantics = [#tpu.dimension_semantics<parallel>, #tpu.dimension_semantics<parallel>], iteration_bounds = array<i64: 2, 1>, scalar_prefetch = 0 : i64, scratch_operands = 0 : i64, tpu.core_type = #tpu.core_type<tc>, window_params = [{transform_indices = @transform_0, window_bounds = array<i64: 1, 16, 256>}, {pipeline_mode = #tpu.pipeline_mode<synchronous>, transform_indices = @transform_1, window_bounds = array<i64: 8, 16>}, {pipeline_mode = #tpu.pipeline_mode<synchronous>, transform_indices = @transform_2, window_bounds = array<i64: 8, 1>}, {pipeline_mode = #tpu.pipeline_mode<synchronous>, transform_indices = @transform_3, window_bounds = array<i64: 16, 8>}, {pipeline_mode = #tpu.pipeline_mode<synchronous>, transform_indices = @transform_4, window_bounds = array<i64: 16, 1>}, {transform_indices = @transform_5, window_bounds = array<i64: 1, 16, 256>}]} {
    %c0 = arith.constant 0 : index
    %c0_0 = arith.constant 0 : index
    %c0_1 = arith.constant 0 : index
    %0 = vector.load %arg2[%c0, %c0_0, %c0_1] : memref<1x16x256xf32, #tpu.memory_space<vmem>>, vector<1x16x256xf32>
    %1 = vector.shape_cast %0 : vector<1x16x256xf32> to vector<16x256xf32>
    %2 = arith.truncf %1 : vector<16x256xf32> to vector<16x256xbf16>
    %c0_2 = arith.constant 0 : index
    %c0_3 = arith.constant 0 : index
    %3 = vector.load %arg3[%c0_2, %c0_3] : memref<8x16xbf16, #tpu.memory_space<vmem>>, vector<8x16xbf16>
    %cst = arith.constant dense<0.000000e+00> : vector<8x256xf32>
    %4 = tpu.matmul %3, %2, %cst {dimension_numbers = #tpu.dot_dimension_numbers<[1], [0], [0], [1], [0, 0, 1, 1], [], []>} : vector<8x16xbf16>, vector<16x256xbf16>, vector<8x256xf32> -> vector<8x256xf32>
    %c0_4 = arith.constant 0 : index
    %c0_5 = arith.constant 0 : index
    %5 = vector.load %arg4[%c0_4, %c0_5] : memref<8x1xf32, #tpu.memory_space<vmem>>, vector<8x1xf32>
    %6 = vector.broadcast %5 : vector<8x1xf32> to vector<8x256xf32>
    %7 = arith.addf %4, %6 : vector<8x256xf32>
    %8 = arith.negf %7 : vector<8x256xf32>
    %9 = math.exp %8 : vector<8x256xf32>
    %cst_6 = arith.constant 1.000000e+00 : f32
    %10 = vector.broadcast %cst_6 : f32 to vector<8x256xf32>
    %11 = arith.addf %10, %9 : vector<8x256xf32>
    %12 = arith.divf %10, %11 : vector<8x256xf32>
    %13 = arith.mulf %7, %12 : vector<8x256xf32>
    %c0_7 = arith.constant 0 : index
    %c0_8 = arith.constant 0 : index
    %14 = vector.load %arg5[%c0_7, %c0_8] : memref<16x8xbf16, #tpu.memory_space<vmem>>, vector<16x8xbf16>
    %15 = arith.truncf %13 : vector<8x256xf32> to vector<8x256xbf16>
    %cst_9 = arith.constant dense<0.000000e+00> : vector<16x256xf32>
    %16 = tpu.matmul %14, %15, %cst_9 {dimension_numbers = #tpu.dot_dimension_numbers<[1], [0], [0], [1], [0, 0, 1, 1], [], []>} : vector<16x8xbf16>, vector<8x256xbf16>, vector<16x256xf32> -> vector<16x256xf32>
    %c0_10 = arith.constant 0 : index
    %c0_11 = arith.constant 0 : index
    %17 = vector.load %arg6[%c0_10, %c0_11] : memref<16x1xf32, #tpu.memory_space<vmem>>, vector<16x1xf32>
    %18 = vector.broadcast %17 : vector<16x1xf32> to vector<16x256xf32>
    %19 = arith.addf %16, %18 : vector<16x256xf32>
    %20 = arith.negf %19 : vector<16x256xf32>
    %21 = math.exp %20 : vector<16x256xf32>
    %cst_12 = arith.constant 1.000000e+00 : f32
    %22 = vector.broadcast %cst_12 : f32 to vector<16x256xf32>
    %23 = arith.addf %22, %21 : vector<16x256xf32>
    %24 = arith.divf %22, %23 : vector<16x256xf32>
    %25 = arith.mulf %19, %24 : vector<16x256xf32>
    %c0_13 = arith.constant 0 : index
    %c0_14 = arith.constant 0 : index
    %c0_15 = arith.constant 0 : index
    %26 = vector.load %arg2[%c0_13, %c0_14, %c0_15] : memref<1x16x256xf32, #tpu.memory_space<vmem>>, vector<1x16x256xf32>
    %27 = vector.shape_cast %26 : vector<1x16x256xf32> to vector<16x256xf32>
    %28 = arith.addf %27, %25 : vector<16x256xf32>
    %c0_16 = arith.constant 0 : index
    %c0_17 = arith.constant 0 : index
    %c0_18 = arith.constant 0 : index
    %29 = vector.load %arg7[%c0_16, %c0_17, %c0_18] : memref<1x16x256xf32, #tpu.memory_space<vmem>>, vector<1x16x256xf32>
    %30 = vector.shape_cast %29 : vector<1x16x256xf32> to vector<16x256xf32>
    %31 = vector.shape_cast %28 : vector<16x256xf32> to vector<1x16x256xf32>
    tpu.vector_store %arg7[%c0_16, %c0_17, %c0_18], %31 {strides = array<i32>} : memref<1x16x256xf32, #tpu.memory_space<vmem>>, vector<1x16x256xf32>,
    return
  }
  func.func @transform_0(%arg0: i32, %arg1: i32) -> (i32, i32, i32) {
    %c0_i32 = arith.constant 0 : i32
    %c0_i32_0 = arith.constant 0 : i32
    return %arg0, %c0_i32, %arg1 : i32, i32, i32
  }
  func.func @transform_1(%arg0: i32, %arg1: i32) -> (i32, i32) {
    %c0_i32 = arith.constant 0 : i32
    %c0_i32_0 = arith.constant 0 : i32
    %c0_i32_1 = arith.constant 0 : i32
    return %c0_i32, %c0_i32_0 : i32, i32
  }
  func.func @transform_2(%arg0: i32, %arg1: i32) -> (i32, i32) {
    %c0_i32 = arith.constant 0 : i32
    %c0_i32_0 = arith.constant 0 : i32
    %c0_i32_1 = arith.constant 0 : i32
    return %c0_i32, %c0_i32_0 : i32, i32
  }
  func.func @transform_3(%arg0: i32, %arg1: i32) -> (i32, i32) {
    %c0_i32 = arith.constant 0 : i32
    %c0_i32_0 = arith.constant 0 : i32
    %c0_i32_1 = arith.constant 0 : i32
    return %c0_i32, %c0_i32_0 : i32, i32
  }
  func.func @transform_4(%arg0: i32, %arg1: i32) -> (i32, i32) {
    %c0_i32 = arith.constant 0 : i32
    %c0_i32_0 = arith.constant 0 : i32
    %c0_i32_1 = arith.constant 0 : i32
    return %c0_i32, %c0_i32_0 : i32, i32
  }
  func.func @transform_5(%arg0: i32, %arg1: i32) -> (i32, i32, i32) {
    %c0_i32 = arith.constant 0 : i32
    %c0_i32_0 = arith.constant 0 : i32
    return %arg0, %c0_i32, %arg1 : i32, i32, i32
  }
}

module attributes {stable_mosaic.version = 11 : i64} {
  func.func @darknet_block_kernel(%arg0: i32, %arg1: i32, %arg2: memref<1x16x256xf32, #tpu.memory_space<vmem>>, %arg3: memref<8x16xbf16, #tpu.memory_space<vmem>>, %arg4: memref<8x1xf32, #tpu.memory_space<vmem>>, %arg5: memref<16x8xbf16, #tpu.memory_space<vmem>>, %arg6: memref<16x1xf32, #tpu.memory_space<vmem>>, %arg7: memref<1x16x256xf32, #tpu.memory_space<vmem>>) attributes {dimension_semantics = [#tpu.dimension_semantics<parallel>, #tpu.dimension_semantics<parallel>], iteration_bounds = array<i64: 2, 1>, scalar_prefetch = 0 : i64, scratch_operands = 0 : i64, tpu.core_type = #tpu.core_type<tc>, window_params = [{transform_indices = @transform_0, window_bounds = array<i64: 1, 16, 256>}, {pipeline_mode = #tpu.pipeline_mode<synchronous>, transform_indices = @transform_1, window_bounds = array<i64: 8, 16>}, {pipeline_mode = #tpu.pipeline_mode<synchronous>, transform_indices = @transform_2, window_bounds = array<i64: 8, 1>}, {pipeline_mode = #tpu.pipeline_mode<synchronous>, transform_indices = @transform_3, window_bounds = array<i64: 16, 8>}, {pipeline_mode = #tpu.pipeline_mode<synchronous>, transform_indices = @transform_4, window_bounds = array<i64: 16, 1>}, {transform_indices = @transform_5, window_bounds = array<i64: 1, 16, 256>}]} {
    %c0 = arith.constant 0 : index
    %c0_0 = arith.constant 0 : index
    %c0_1 = arith.constant 0 : index
    %0 = vector.load %arg2[%c0, %c0_0, %c0_1] : memref<1x16x256xf32, #tpu.memory_space<vmem>>, vector<1x16x256xf32>
    %1 = vector.shape_cast %0 : vector<1x16x256xf32> to vector<16x256xf32>
    %2 = arith.truncf %1 : vector<16x256xf32> to vector<16x256xbf16>
    %c0_2 = arith.constant 0 : index
    %c0_3 = arith.constant 0 : index
    %3 = vector.load %arg3[%c0_2, %c0_3] : memref<8x16xbf16, #tpu.memory_space<vmem>>, vector<8x16xbf16>
    %cst = arith.constant dense<0.000000e+00> : vector<8x256xf32>
    %4 = tpu.matmul %3, %2, %cst {dimension_numbers = #tpu.dot_dimension_numbers<[1], [0], [0], [1], [0, 0, 1, 1], [], []>} : vector<8x16xbf16>, vector<16x256xbf16>, vector<8x256xf32> -> vector<8x256xf32>
    %c0_4 = arith.constant 0 : index
    %c0_5 = arith.constant 0 : index
    %5 = vector.load %arg4[%c0_4, %c0_5] : memref<8x1xf32, #tpu.memory_space<vmem>>, vector<8x1xf32>
    %6 = vector.broadcast %5 : vector<8x1xf32> to vector<8x256xf32>
    %7 = arith.addf %4, %6 : vector<8x256xf32>
    %8 = arith.negf %7 : vector<8x256xf32>
    %9 = math.exp %8 : vector<8x256xf32>
    %cst_6 = arith.constant 1.000000e+00 : f32
    %10 = vector.broadcast %cst_6 : f32 to vector<8x256xf32>
    %11 = arith.addf %10, %9 : vector<8x256xf32>
    %12 = arith.divf %10, %11 : vector<8x256xf32>
    %13 = arith.mulf %7, %12 : vector<8x256xf32>
    %c0_7 = arith.constant 0 : index
    %c0_8 = arith.constant 0 : index
    %14 = vector.load %arg5[%c0_7, %c0_8] : memref<16x8xbf16, #tpu.memory_space<vmem>>, vector<16x8xbf16>
    %15 = arith.truncf %13 : vector<8x256xf32> to vector<8x256xbf16>
    %cst_9 = arith.constant dense<0.000000e+00> : vector<16x256xf32>
    %16 = tpu.matmul %14, %15, %cst_9 {dimension_numbers = #tpu.dot_dimension_numbers<[1], [0], [0], [1], [0, 0, 1, 1], [], []>} : vector<16x8xbf16>, vector<8x256xbf16>, vector<16x256xf32> -> vector<16x256xf32>
    %c0_10 = arith.constant 0 : index
    %c0_11 = arith.constant 0 : index
    %17 = vector.load %arg6[%c0_10, %c0_11] : memref<16x1xf32, #tpu.memory_space<vmem>>, vector<16x1xf32>
    %18 = vector.broadcast %17 : vector<16x1xf32> to vector<16x256xf32>
    %19 = arith.addf %16, %18 : vector<16x256xf32>
    %20 = arith.negf %19 : vector<16x256xf32>
    %21 = math.exp %20 : vector<16x256xf32>
    %cst_12 = arith.constant 1.000000e+00 : f32
    %22 = vector.broadcast %cst_12 : f32 to vector<16x256xf32>
    %23 = arith.addf %22, %21 : vector<16x256xf32>
    %24 = arith.divf %22, %23 : vector<16x256xf32>
    %25 = arith.mulf %19, %24 : vector<16x256xf32>
    %c0_13 = arith.constant 0 : index
    %c0_14 = arith.constant 0 : index
    %c0_15 = arith.constant 0 : index
    %26 = vector.load %arg2[%c0_13, %c0_14, %c0_15] : memref<1x16x256xf32, #tpu.memory_space<vmem>>, vector<1x16x256xf32>
    %27 = vector.shape_cast %26 : vector<1x16x256xf32> to vector<16x256xf32>
    %28 = arith.addf %27, %25 : vector<16x256xf32>
    %c0_16 = arith.constant 0 : index
    %c0_17 = arith.constant 0 : index
    %c0_18 = arith.constant 0 : index
    %29 = vector.load %arg7[%c0_16, %c0_17, %c0_18] : memref<1x16x256xf32, #tpu.memory_space<vmem>>, vector<1x16x256xf32>
    %30 = vector.shape_cast %29 : vector<1x16x256xf32> to vector<16x256xf32>
    %31 = vector.shape_cast %28 : vector<16x256xf32> to vector<1x16x256xf32>
    tpu.vector_store %arg7[%c0_16, %c0_17, %c0_18], %31 {strides = array<i32>} : memref<1x16x256xf32, #tpu.memory_space<vmem>>, vector<1x16x256xf32>,
    return
  }
  func.func @transform_0(%arg0: i32, %arg1: i32) -> (i32, i32, i32) {
    %c0_i32 = arith.constant 0 : i32
    %c0_i32_0 = arith.constant 0 : i32
    return %arg0, %c0_i32, %arg1 : i32, i32, i32
  }
  func.func @transform_1(%arg0: i32, %arg1: i32) -> (i32, i32) {
    %c0_i32 = arith.constant 0 : i32
    %c0_i32_0 = arith.constant 0 : i32
    %c0_i32_1 = arith.constant 0 : i32
    return %c0_i32, %c0_i32_0 : i32, i32
  }
  func.func @transform_2(%arg0: i32, %arg1: i32) -> (i32, i32) {
    %c0_i32 = arith.constant 0 : i32
    %c0_i32_0 = arith.constant 0 : i32
    %c0_i32_1 = arith.constant 0 : i32
    return %c0_i32, %c0_i32_0 : i32, i32
  }
  func.func @transform_3(%arg0: i32, %arg1: i32) -> (i32, i32) {
    %c0_i32 = arith.constant 0 : i32
    %c0_i32_0 = arith.constant 0 : i32
    %c0_i32_1 = arith.constant 0 : i32
    return %c0_i32, %c0_i32_0 : i32, i32
  }
  func.func @transform_4(%arg0: i32, %arg1: i32) -> (i32, i32) {
    %c0_i32 = arith.constant 0 : i32
    %c0_i32_0 = arith.constant 0 : i32
    %c0_i32_1 = arith.constant 0 : i32
    return %c0_i32, %c0_i32_0 : i32, i32
  }
  func.func @transform_5(%arg0: i32, %arg1: i32) -> (i32, i32, i32) {
    %c0_i32 = arith.constant 0 : i32
    %c0_i32_0 = arith.constant 0 : i32
    return %arg0, %c0_i32, %arg1 : i32, i32, i32
  }
}

</mosaic_0001>

<llo_original>
// kernel: tpu_custom_call.1
$region0: #{tpu_custom_call.1}
  #allocation0 [shape = 'u32[]', space=smem, size = 0x4, offset = 0x4, fixed_abs, tag = 'smem constant byte address 0x4 - core index']
  #allocation1 [shape = 'u32[144,128]{1,0:T(1,128)}', space=vmem, size = 0x12000, scoped, tag = 'internal scratch']
  %s0 = inlined_call_operand.hbm [shape: f32[2,16,256], index: 0, kind: input, shape index: {}]
  %s1 = inlined_call_operand.vmem [shape: bf16[8,16], index: 1, kind: input, shape index: {}]
  %s2 = inlined_call_operand.vmem [shape: f32[8,1], index: 2, kind: input, shape index: {}]
  %s3 = inlined_call_operand.vmem [shape: bf16[16,8], index: 3, kind: input, shape index: {}]
  %s4 = inlined_call_operand.vmem [shape: f32[16,1], index: 4, kind: input, shape index: {}]
  %s5 = inlined_call_operand.hbm [shape: f32[2,16,256], index: 5, kind: output, shape index: {}]
  %s6 = sld [smem:[#allocation0]]
  $region57: #{tpu_custom_call.1} parent=0
    _
  %s8 = ssub.s32 1, %s6
  %s9 = scalar_select 0, %s8, %s6
  $region1: #{tpu_custom_call.1} parent=0
    #allocation2 [shape = 'u8[32768]{0}', space=vmem, size = 0x8000, scoped, tag = 'input window, operand 0']
    #allocation3 [shape = 's32[2]{0}', space=sflag, size = 0x8, scoped, tag = 'scoped memory for tpu_custom_call.1']
    #allocation4 [shape = 's32[2]{0}', space=sflag, size = 0x8, scoped, tag = 'scoped memory for tpu_custom_call.1']
    #allocation5 [shape = 'u8[32768]{0}', space=vmem, size = 0x8000, scoped, tag = 'output window, operand 0']
    %10 = vsyncpa [#allocation3], 0
    %s11 = scalar_lea.sflag [#allocation3], 1
    %12 = vsyncpa %s11, 0
    %13 = vsyncpa [#allocation4], 0
    %s14 = scalar_lea.sflag [#allocation4], 1
    %15 = vsyncpa %s14, 0
    loop: start=0, step=1, limit=4
    $region2: #{tpu_custom_call.1} parent=1 // loop_pre_header
      _
    $region3: #{tpu_custom_call.1} parent=1 // loop_header
      %s17 = sphi 0, %s21
      %p18 = scmp.ge.s32.totalorder %s17, 4
      %s24 = sphi 0, %s36
      %s25 = sphi 0, %s32
      %s26 = sphi 0, %s24
      %s27 = sphi 0, %s25
      %s28 = sphi 0, %s26
      %s29 = sphi 0, %s27
      %s41 = sphi 0, %s43
      %s44 = sphi 0, %s41
      %s45 = sphi 0, %s44
      %s61 = sphi 0, %s45
      %s65 = sphi 0, %s65
      %s67 = sphi 0, %s65
      %s68 = sphi 0, %s67
      %s82 = sphi 0, %s68
      %s86 = sphi 0, %s86
      %s88 = sphi 0, %s86
      %s89 = sphi 0, %s88
      %s103 = sphi 0, %s89
      %s107 = sphi 0, %s107
      %s109 = sphi 0, %s107
      %s110 = sphi 0, %s109
      %s124 = sphi 0, %s110
      %s128 = sphi 0, %s128
      %s130 = sphi 0, %s128
      %s131 = sphi 0, %s130
      %s145 = sphi 0, %s131
      %s153 = sphi 0, %s155
      %s156 = sphi 0, %s153
      %s157 = sphi 0, %s156
      %s173 = sphi 0, %s157
    $region4: #{tpu_custom_call.1} parent=1 // loop_header_branch
      %20 = sbr.rel (%p18) target = $region8
    $region5: #{tpu_custom_call.1} parent=1 // loop_body
      %s22 = ssub.s32 %s17, 1
      %s23 = ssub.s32 %s17, 2
      %s30 = sadd.s32 1, %s25
      %p31 = scmp.ge.s32.totalorder %s30, 1
      %s32 = scalar_select %p31, 0, %s30
      %s33 = sadd.s32 1, %s24
      %s34 = scalar_select %p31, %s33, %s24
      %p35 = scmp.ge.s32.totalorder %s34, 2
      %s36 = scalar_select %p35, 0, %s34
      %s37 = ssub.s32 %s24, %s36
      %s38 = ssub.s32 %s25, %s32
      %s39 = sor.u32 %s37, %s38
      %p40 = scmp.eq.s32.totalorder %s39, 0
      %s42 = sadd.s32 %s41, 1
      %s43 = scalar_select %p40, %s41, %s42
      %p46 = pneg %p40
      %p47 = scmp.eq.s32.totalorder %s17, 1
      %p48 = por %p46, %p47
      %p49 = scmp.ne.s32.totalorder %s41, %s44
      %p50 = scmp.eq.s32.totalorder %s17, 0
      %p51 = por %p49, %p50
      %p52 = scmp.ne.s32.totalorder %s41, %s44
      %p53 = scmp.eq.s32.totalorder %s22, 1
      %p54 = por %p52, %p53
      %p55 = scmp.ne.s32.totalorder %s44, %s45
      %p56 = scmp.eq.s32.totalorder %s22, 0
      %p57 = por %p55, %p56
      %p58 = scmp.ne.s32.totalorder %s44, %s45
      %p59 = scmp.eq.s32.totalorder %s23, 1
      %p60 = por %p58, %p59
      %p62 = scmp.ne.s32.totalorder %s45, %s61
      %p63 = scmp.eq.s32.totalorder %s23, 0
      %p64 = por %p62, %p63
      %s66 = sadd.s32 %s65, 1
      %p69 = scmp.eq.s32.totalorder %s17, 1
      %p70 = scmp.ne.s32.totalorder %s65, %s67
      %p71 = scmp.eq.s32.totalorder %s17, 0
      %p72 = por %p70, %p71
      %p73 = scmp.ne.s32.totalorder %s65, %s67
      %p74 = scmp.eq.s32.totalorder %s22, 1
      %p75 = por %p73, %p74
      %p76 = scmp.ne.s32.totalorder %s67, %s68
      %p77 = scmp.eq.s32.totalorder %s22, 0
      %p78 = por %p76, %p77
      %p79 = scmp.ne.s32.totalorder %s67, %s68
      %p80 = scmp.eq.s32.totalorder %s23, 1
      %p81 = por %p79, %p80
      %p83 = scmp.ne.s32.totalorder %s68, %s82
      %p84 = scmp.eq.s32.totalorder %s23, 0
      %p85 = por %p83, %p84
      %s87 = sadd.s32 %s86, 1
      %p90 = scmp.eq.s32.totalorder %s17, 1
      %p91 = scmp.ne.s32.totalorder %s86, %s88
      %p92 = scmp.eq.s32.totalorder %s17, 0
      %p93 = por %p91, %p92
      %p94 = scmp.ne.s32.totalorder %s86, %s88
      %p95 = scmp.eq.s32.totalorder %s22, 1
      %p96 = por %p94, %p95
      %p97 = scmp.ne.s32.totalorder %s88, %s89
      %p98 = scmp.eq.s32.totalorder %s22, 0
      %p99 = por %p97, %p98
      %p100 = scmp.ne.s32.totalorder %s88, %s89
      %p101 = scmp.eq.s32.totalorder %s23, 1
      %p102 = por %p100, %p101
      %p104 = scmp.ne.s32.totalorder %s89, %s103
      %p105 = scmp.eq.s32.totalorder %s23, 0
      %p106 = por %p104, %p105
      %s108 = sadd.s32 %s107, 1
      %p111 = scmp.eq.s32.totalorder %s17, 1
      %p112 = scmp.ne.s32.totalorder %s107, %s109
      %p113 = scmp.eq.s32.totalorder %s17, 0
      %p114 = por %p112, %p113
      %p115 = scmp.ne.s32.totalorder %s107, %s109
      %p116 = scmp.eq.s32.totalorder %s22, 1
      %p117 = por %p115, %p116
      %p118 = scmp.ne.s32.totalorder %s109, %s110
      %p119 = scmp.eq.s32.totalorder %s22, 0
      %p120 = por %p118, %p119
      %p121 = scmp.ne.s32.totalorder %s109, %s110
      %p122 = scmp.eq.s32.totalorder %s23, 1
      %p123 = por %p121, %p122
      %p125 = scmp.ne.s32.totalorder %s110, %s124
      %p126 = scmp.eq.s32.totalorder %s23, 0
      %p127 = por %p125, %p126
      %s129 = sadd.s32 %s128, 1
      %p132 = scmp.eq.s32.totalorder %s17, 1
      %p133 = scmp.ne.s32.totalorder %s128, %s130
      %p134 = scmp.eq.s32.totalorder %s17, 0
      %p135 = por %p133, %p134
      %p136 = scmp.ne.s32.totalorder %s128, %s130
      %p137 = scmp.eq.s32.totalorder %s22, 1
      %p138 = por %p136, %p137
      %p139 = scmp.ne.s32.totalorder %s130, %s131
      %p140 = scmp.eq.s32.totalorder %s22, 0
      %p141 = por %p139, %p140
      %p142 = scmp.ne.s32.totalorder %s130, %s131
      %p143 = scmp.eq.s32.totalorder %s23, 1
      %p144 = por %p142, %p143
      %p146 = scmp.ne.s32.totalorder %s131, %s145
      %p147 = scmp.eq.s32.totalorder %s23, 0
      %p148 = por %p146, %p147
      %s149 = ssub.s32 %s24, %s36
      %s150 = ssub.s32 %s25, %s32
      %s151 = sor.u32 %s149, %s150
      %p152 = scmp.eq.s32.totalorder %s151, 0
      %s154 = sadd.s32 %s153, 1
      %s155 = scalar_select %p152, %s153, %s154
      %p158 = pneg %p152
      %p159 = scmp.eq.s32.totalorder %s17, 1
      %p160 = por %p158, %p159
      %p161 = scmp.ne.s32.totalorder %s153, %s156
      %p162 = scmp.eq.s32.totalorder %s17, 0
      %p163 = por %p161, %p162
      %p164 = scmp.ne.s32.totalorder %s153, %s156
      %p165 = scmp.eq.s32.totalorder %s22, 1
      %p166 = por %p164, %p165
      %p167 = scmp.ne.s32.totalorder %s156, %s157
      %p168 = scmp.eq.s32.totalorder %s22, 0
      %p169 = por %p167, %p168
      %p170 = scmp.ne.s32.totalorder %s156, %s157
      %p171 = scmp.eq.s32.totalorder %s23, 1
      %p172 = por %p170, %p171
      %p174 = scmp.ne.s32.totalorder %s157, %s173
      %p175 = scmp.eq.s32.totalorder %s23, 0
      %p176 = por %p174, %p175
      %p177 = scmp.le.s32.totalorder 1, %s17
      %p178 = scmp.lt.s32.totalorder %s17, 3
      %p179 = pnand %p177, %p178
      %p180 = pneg %p179
      // Predicated region
      $region9: #{tpu_custom_call.1} parent=5 // pred_check
        _
      $region10: #{tpu_custom_call.1} parent=5 // pred_check_branch
        %182 = sbr.rel (%p179) target = $region12
      $region11: #{tpu_custom_call.1} parent=5 // pred_region
        %s183 = ssub.s32 %s17, 1
        // Predicated region
        $region13: #{tpu_custom_call.1} parent=11 // pred_check
          %p184 = pneg %p78
        $region14: #{tpu_custom_call.1} parent=11 // pred_check_branch
          %186 = sbr.rel (%p184) target = $region16
        $region15: #{tpu_custom_call.1} parent=11 // pred_region
          _
        $region16: #{tpu_custom_call.1} parent=11 // pred_fallthru
          _
        // Predicated region
        $region17: #{tpu_custom_call.1} parent=11 // pred_check
          %p187 = pneg %p99
        $region18: #{tpu_custom_call.1} parent=11 // pred_check_branch
          %189 = sbr.rel (%p187) target = $region20
        $region19: #{tpu_custom_call.1} parent=11 // pred_region
          _
        $region20: #{tpu_custom_call.1} parent=11 // pred_fallthru
          _
        // Predicated region
        $region21: #{tpu_custom_call.1} parent=11 // pred_check
          %p190 = pneg %p120
        $region22: #{tpu_custom_call.1} parent=11 // pred_check_branch
          %192 = sbr.rel (%p190) target = $region24
        $region23: #{tpu_custom_call.1} parent=11 // pred_region
          _
        $region24: #{tpu_custom_call.1} parent=11 // pred_fallthru
          _
        // Predicated region
        $region25: #{tpu_custom_call.1} parent=11 // pred_check
          %p193 = pneg %p141
        $region26: #{tpu_custom_call.1} parent=11 // pred_check_branch
          %195 = sbr.rel (%p193) target = $region28
        $region27: #{tpu_custom_call.1} parent=11 // pred_region
          _
        $region28: #{tpu_custom_call.1} parent=11 // pred_fallthru
          _
      $region12: #{tpu_custom_call.1} parent=5 // pred_fallthru
        _
      %p196 = scmp.lt.s32.totalorder %s17, 2
      // Predicated region
      $region29: #{tpu_custom_call.1} parent=5 // pred_check
        %p197 = pneg %p196
      $region30: #{tpu_custom_call.1} parent=5 // pred_check_branch
        %199 = sbr.rel (%p197) target = $region32
      $region31: #{tpu_custom_call.1} parent=5 // pred_region
        // Predicated region
        $region33: #{tpu_custom_call.1} parent=31 // pred_check
          %p200 = pneg %p51
        $region34: #{tpu_custom_call.1} parent=31 // pred_check_branch
          %202 = sbr.rel (%p200) target = $region36
        $region35: #{tpu_custom_call.1} parent=31 // pred_region
          %s203 = sand.u32 %s41, 1
          %s204 = scalar_lea.sflag [#allocation3], %s203
          %s205 = sand.u32 %s41, 1
          %s206 = smul.addr %s205, 32
          %s207 = scalar_lea.vmem [#allocation2], %s206
          %s208 = smul.u32 2, %s25
          %s210 = ssub.s32 512, 512
          %211 = vsyncadd %s204, %s210
          %s212 = smul.addr %s24, 4
          %s213 = sadd.s32 %s208, %s212
          %s214 = smul.addr %s213, 128
          %s215 = scalar_lea.hbm %s0, %s214
          %s216 = sshll.u32 %s207, 4
          %s217 = int_to_ptr.vmem [resolvable:$true] %s216
          %222 = dma.hbm_to_vmem [thread:$0]  %s215, 512, %s217, %s204, 256, 256, 16
        $region36: #{tpu_custom_call.1} parent=31 // pred_fallthru
          _
      $region32: #{tpu_custom_call.1} parent=5 // pred_fallthru
        _
      %p223 = scmp.le.s32.totalorder 1, %s17
      %p224 = scmp.lt.s32.totalorder %s17, 3
      %p225 = pnand %p223, %p224
      %p226 = pneg %p225
      // Predicated region
      $region37: #{tpu_custom_call.1} parent=5 // pred_check
        _
      $region38: #{tpu_custom_call.1} parent=5 // pred_check_branch
        %228 = sbr.rel (%p225) target = $region40
      $region39: #{tpu_custom_call.1} parent=5 // pred_region
        %s229 = ssub.s32 %s17, 1
        %s230 = sand.u32 %s44, 1
        %s231 = scalar_lea.sflag [#allocation3], %s230
        %s232 = sand.u32 %s44, 1
        %s233 = smul.addr %s232, 32
        %s234 = scalar_lea.vmem [#allocation2], %s233
        // Predicated region
        $region41: #{tpu_custom_call.1} parent=39 // pred_check
          %p235 = pneg %p57
        $region42: #{tpu_custom_call.1} parent=39 // pred_check_branch
          %237 = sbr.rel (%p235) target = $region44
        $region43: #{tpu_custom_call.1} parent=39 // pred_region
          %238 = dma.done %s231, 512
        $region44: #{tpu_custom_call.1} parent=39 // pred_fallthru
          _
        %s239 = sand.u32 %s44, 1
        %s240 = scalar_lea.sflag [#allocation3], %s239
        %s241 = sand.u32 %s44, 1
        %s242 = smul.addr %s241, 32
        %s243 = scalar_lea.vmem [#allocation2], %s242
        %p244 = pneg %p57
        %p245 = pneg %p54
        %p246 = pneg %p78
        %p247 = pneg %p75
        %p248 = pneg %p99
        %p249 = pneg %p96
        %p250 = pneg %p120
        %p251 = pneg %p117
        %p252 = pneg %p141
        %p253 = pneg %p138
        %p254 = pneg %p169
        %p255 = pneg %p166
        %s256 = sand.u32 %s156, 1
        %s257 = scalar_lea.sflag [#allocation4], %s256
        %s258 = sand.u32 %s156, 1
        %s259 = smul.addr %s258, 32
        %s260 = scalar_lea.vmem [#allocation5], %s259
        %s261 = smul.u32 2, %s27
        %s262 = smul.u32 2, %s27
        %v264 = vld [vmem:[%s234] sm:$0xff]
        %v265 = vld [vmem:[%s234 + $0x8] sm:$0xff]
        %v266 = vld [vmem:[%s234 + $0x10] sm:$0xff]
        %v267 = vld [vmem:[%s234 + $0x18] sm:$0xff]
        %v268 = vpack.c.bf16 %v266, %v264
        %v269 = vpack.c.bf16 %v267, %v265
        %v270 = vld [vmem:[%s1] sm:$0xf]
        %v271 = vld [vmem:[%s2] sm:$0xff]
        %273 = vset.pattern.permute.xlu0 0
        %274 = vperm.xlu0 %273, %v271
        %v275 = vpop.permute.xlu0 %274
        %vm277 = vcmask 130048
        %v279 = vsel %vm277, %v270, 0
        %281 = vmatprep.subr.bf16.mxu0 0
        %282 = vmatpush1.bf16.msra.mxu0 0
        %283 = vmatprep.subr.bf16.mxu0 0
        %284 = vmatpush1.bf16.msra.mxu0 0
        %285 = vmatprep.subr.bf16.mxu0 0
        %286 = vmatpush1.bf16.msra.mxu0 0
        %287 = vmatprep.subr.bf16.mxu0 0
        %288 = vmatpush1.bf16.msra.mxu0 0
        %289 = vmatprep.subr.bf16.mxu0 0
        %290 = vmatpush1.bf16.msra.mxu0 0
        %291 = vmatprep.subr.bf16.mxu0 0
        %292 = vmatpush1.bf16.msra.mxu0 0
        %293 = vmatprep.subr.bf16.mxu0 0
        %294 = vmatpush1.bf16.msra.mxu0 0
        %295 = vmatprep.subr.bf16.mxu0 %v269
        %296 = vmatpush1.bf16.msra.mxu0 %v268
        %297 = vmatprep.subr.bf16.mxu0 0
        %298 = vmatpush2.bf16.msra.mxu0 0
        %299 = vmatprep.subr.bf16.mxu0 0
        %300 = vmatpush2.bf16.msra.mxu0 0
        %301 = vmatprep.subr.bf16.mxu0 0
        %302 = vmatpush2.bf16.msra.mxu0 0
        %303 = vmatprep.subr.bf16.mxu0 0
        %304 = vmatpush2.bf16.msra.mxu0 0
        %305 = vmatprep.subr.bf16.mxu0 0
        %306 = vmatpush2.bf16.msra.mxu0 0
        %307 = vmatprep.subr.bf16.mxu0 0
        %308 = vmatpush2.bf16.msra.mxu0 0
        %309 = vmatprep.subr.bf16.mxu0 0
        %310 = vmatpush2.bf16.msra.mxu0 0
        %311 = vmatprep.subr.bf16.mxu0 0
        %312 = vmatpush2.bf16.msra.mxu0 0
        %313 = vmatprep.mubr.bf16.mxu0 0
        %314 = vmatmul.mubr.bf16.gmra.mxu0 %v279
        %v315 = vpop.f32.mrf.mxu0
        %v316 = vadd.f32 %v275, %v315
        %v317 = vpop.f32.mrf.mxu0
        %v318 = vadd.f32 %v275, %v317
        %v319 = vpop.f32.mrf.mxu0
        %v320 = vpop.f32.mrf.mxu0
        %321 = vdwg.mxu0
        %v322 = vxor.u32 %v316, 2147483648
        %v323 = vxor.u32 %v318, 2147483648
        %v324 = vmul.f32 %v322, 1.442695
        %v325 = vpow.pop %v324
        %v326 = vmul.f32 %v323, 1.442695
        %v327 = vpow.pop %v326
        %v328 = vadd.f32 %v325, 1.0
        %v329 = vadd.f32 %v327, 1.0
        %v330 = vrcp.pop %v328
        %v331 = vmul.f32 1.0, %v330
        %v332 = vrcp.pop %v329
        %v333 = vmul.f32 1.0, %v332
        %v334 = vmul.f32 %v316, %v331
        %v335 = vmul.f32 %v318, %v333
        %v336 = vld [vmem:[%s3] sm:$0xf]
        %v337 = vld [vmem:[%s3 + $0x4] sm:$0xf]
        %v338 = vpack.c.bf16 %v334, %v334
        %v339 = vpack.c.bf16 %v335, %v335
        %v340 = vld [vmem:[%s4] sm:$0xff]
        %v341 = vld [vmem:[%s4 + $0x8] sm:$0xff]
        %343 = vset.pattern.permute.xlu0 0
        %344 = vperm.xlu0 %343, %v340
        %v345 = vpop.permute.xlu0 %344
        %348 = vset.pattern.permute.xlu0 0
        %349 = vperm.xlu0 %348, %v341
        %v350 = vpop.permute.xlu0 %349
        %v354 = vunpack.c.l.b16 %v336
        %v355 = vunpack.c.l.b16 %v337
        %v356 = vpack.c.b16 %v355, %v354
        %vm357 = vcmask 64512
        %v359 = vsel %vm357, %v356, 0
        %vm361 = vcmask 1043456
        %v363 = vsel %vm361, %v338, 0
        %v366 = vsel %vm361, %v339, 0
        %368 = vmatprep.subr.bf16.mxu0 0
        %369 = vmatpush1.bf16.msra.mxu0 0
        %370 = vmatprep.subr.bf16.mxu0 0
        %371 = vmatpush1.bf16.msra.mxu0 0
        %372 = vmatprep.subr.bf16.mxu0 0
        %373 = vmatpush1.bf16.msra.mxu0 0
        %374 = vmatprep.subr.bf16.mxu0 0
        %375 = vmatpush1.bf16.msra.mxu0 0
        %376 = vmatprep.subr.bf16.mxu0 0
        %377 = vmatpush1.bf16.msra.mxu0 0
        %378 = vmatprep.subr.bf16.mxu0 0
        %379 = vmatpush1.bf16.msra.mxu0 0
        %380 = vmatprep.subr.bf16.mxu0 0
        %381 = vmatpush1.bf16.msra.mxu0 0
        %382 = vmatprep.subr.bf16.mxu0 %v366
        %383 = vmatpush1.bf16.msra.mxu0 %v363
        %384 = vmatprep.subr.bf16.mxu0 0
        %385 = vmatpush2.bf16.msra.mxu0 0
        %386 = vmatprep.subr.bf16.mxu0 0
        %387 = vmatpush2.bf16.msra.mxu0 0
        %388 = vmatprep.subr.bf16.mxu0 0
        %389 = vmatpush2.bf16.msra.mxu0 0
        %390 = vmatprep.subr.bf16.mxu0 0
        %391 = vmatpush2.bf16.msra.mxu0 0
        %392 = vmatprep.subr.bf16.mxu0 0
        %393 = vmatpush2.bf16.msra.mxu0 0
        %394 = vmatprep.subr.bf16.mxu0 0
        %395 = vmatpush2.bf16.msra.mxu0 0
        %396 = vmatprep.subr.bf16.mxu0 0
        %397 = vmatpush2.bf16.msra.mxu0 0
        %398 = vmatprep.subr.bf16.mxu0 0
        %399 = vmatpush2.bf16.msra.mxu0 0
        %400 = vmatprep.mubr.bf16.mxu0 0
        %401 = vmatmul.mubr.bf16.gmra.mxu0 %v359
        %v402 = vpop.f32.mrf.mxu0
        %v403 = vadd.f32 %v345, %v402
        %v404 = vpop.f32.mrf.mxu0
        %v405 = vadd.f32 %v345, %v404
        %v406 = vpop.f32.mrf.mxu0
        %v407 = vadd.f32 %v350, %v406
        %v408 = vpop.f32.mrf.mxu0
        %v409 = vadd.f32 %v350, %v408
        %410 = vdwg.mxu0
        %v411 = vxor.u32 %v403, 2147483648
        %v412 = vxor.u32 %v405, 2147483648
        %v413 = vxor.u32 %v407, 2147483648
        %v414 = vxor.u32 %v409, 2147483648
        %v415 = vmul.f32 %v411, 1.442695
        %v416 = vpow.pop %v415
        %v417 = vmul.f32 %v412, 1.442695
        %v418 = vpow.pop %v417
        %v419 = vmul.f32 %v413, 1.442695
        %v420 = vpow.pop %v419
        %v421 = vmul.f32 %v414, 1.442695
        %v422 = vpow.pop %v421
        %v423 = vadd.f32 %v416, 1.0
        %v424 = vadd.f32 %v418, 1.0
        %v425 = vadd.f32 %v420, 1.0
        %v426 = vadd.f32 %v422, 1.0
        %v427 = vrcp.pop %v423
        %v428 = vmul.f32 1.0, %v427
        %v429 = vrcp.pop %v424
        %v430 = vmul.f32 1.0, %v429
        %v431 = vrcp.pop %v425
        %v432 = vmul.f32 1.0, %v431
        %v433 = vrcp.pop %v426
        %v434 = vmul.f32 1.0, %v433
        %v435 = vmul.f32 %v403, %v428
        %v436 = vmul.f32 %v405, %v430
        %v437 = vmul.f32 %v407, %v432
        %v438 = vmul.f32 %v409, %v434
        %v439 = vadd.f32 %v264, %v435
        %v440 = vadd.f32 %v265, %v436
        %v441 = vadd.f32 %v266, %v437
        %v442 = vadd.f32 %v267, %v438
        %443 = vst [vmem:[%s260] sm:$0xff] %v439
        %444 = vst [vmem:[%s260 + $0x8] sm:$0xff] %v440
        %445 = vst [vmem:[%s260 + $0x10] sm:$0xff] %v441
        %446 = vst [vmem:[%s260 + $0x18] sm:$0xff] %v442
        %s447 = sand.u32 %s156, 1
        %s448 = scalar_lea.sflag [#allocation4], %s447
        %s449 = sand.u32 %s156, 1
        %s450 = smul.addr %s449, 32
        %s451 = scalar_lea.vmem [#allocation5], %s450
        // Predicated region
        $region45: #{tpu_custom_call.1} parent=39 // pred_check
          %p452 = pneg %p166
        $region46: #{tpu_custom_call.1} parent=39 // pred_check_branch
          %454 = sbr.rel (%p452) target = $region48
        $region47: #{tpu_custom_call.1} parent=39 // pred_region
          %s455 = smul.u32 2, %s27
          %s457 = ssub.s32 512, 512
          %458 = vsyncadd %s448, %s457
          %s459 = smul.addr %s26, 4
          %s460 = sadd.s32 %s455, %s459
          %s461 = smul.addr %s460, 128
          %s462 = scalar_lea.hbm %s5, %s461
          %s463 = sshll.u32 %s451, 4
          %s464 = int_to_ptr.vmem [resolvable:$true] %s463
          %469 = dma.vmem_to_hbm [thread:$0]  %s464, 512, %s462, %s448, 256, 256, 16
        $region48: #{tpu_custom_call.1} parent=39 // pred_fallthru
          _
      $region40: #{tpu_custom_call.1} parent=5 // pred_fallthru
        _
      %p470 = scmp.le.s32.totalorder 2, %s17
      // Predicated region
      $region49: #{tpu_custom_call.1} parent=5 // pred_check
        %p471 = pneg %p470
      $region50: #{tpu_custom_call.1} parent=5 // pred_check_branch
        %473 = sbr.rel (%p471) target = $region52
      $region51: #{tpu_custom_call.1} parent=5 // pred_region
        %s474 = ssub.s32 %s17, 2
        // Predicated region
        $region53: #{tpu_custom_call.1} parent=51 // pred_check
          %p475 = pneg %p172
        $region54: #{tpu_custom_call.1} parent=51 // pred_check_branch
          %477 = sbr.rel (%p475) target = $region56
        $region55: #{tpu_custom_call.1} parent=51 // pred_region
          %s478 = sand.u32 %s157, 1
          %s479 = scalar_lea.sflag [#allocation4], %s478
          %s480 = sand.u32 %s157, 1
          %s481 = smul.addr %s480, 32
          %s482 = scalar_lea.vmem [#allocation5], %s481
          %483 = dma.done %s479, 512
        $region56: #{tpu_custom_call.1} parent=51 // pred_fallthru
          _
      $region52: #{tpu_custom_call.1} parent=5 // pred_fallthru
        _
    $region6: #{tpu_custom_call.1} parent=1 // loop_footer
      %s21 = sadd.s32 1, %s17
    $region7: #{tpu_custom_call.1} parent=1 // loop_footer_branch
      %16 = sbr.rel target = $region3
    $region8: #{tpu_custom_call.1} parent=1 // loop_exit
      _
    %484 = vsyncpa [#allocation3], 1
    %s485 = scalar_lea.sflag [#allocation3], 1
    %486 = vsyncpa %s485, 1
    %487 = vsyncpa [#allocation4], 1
    %s488 = scalar_lea.sflag [#allocation4], 1
    %489 = vsyncpa %s488, 1

// kernel: tpu_custom_call.1
$region0: #{tpu_custom_call.1}
  #allocation0 [shape = 'u32[]', space=smem, size = 0x4, offset = 0x4, fixed_abs, tag = 'smem constant byte address 0x4 - core index']
  #allocation1 [shape = 'u32[144,128]{1,0:T(1,128)}', space=vmem, size = 0x12000, scoped, tag = 'internal scratch']
  %s0 = inlined_call_operand.hbm [shape: f32[2,16,256], index: 0, kind: input, shape index: {}]
  %s1 = inlined_call_operand.vmem [shape: bf16[8,16], index: 1, kind: input, shape index: {}]
  %s2 = inlined_call_operand.vmem [shape: f32[8,1], index: 2, kind: input, shape index: {}]
  %s3 = inlined_call_operand.vmem [shape: bf16[16,8], index: 3, kind: input, shape index: {}]
  %s4 = inlined_call_operand.vmem [shape: f32[16,1], index: 4, kind: input, shape index: {}]
  %s5 = inlined_call_operand.hbm [shape: f32[2,16,256], index: 5, kind: output, shape index: {}]
  %s6 = sld [smem:[#allocation0]]
  $region57: #{tpu_custom_call.1} parent=0
    _
  %s8 = ssub.s32 1, %s6
  %s9 = scalar_select 0, %s8, %s6
  $region1: #{tpu_custom_call.1} parent=0
    #allocation2 [shape = 'u8[32768]{0}', space=vmem, size = 0x8000, scoped, tag = 'input window, operand 0']
    #allocation3 [shape = 's32[2]{0}', space=sflag, size = 0x8, scoped, tag = 'scoped memory for tpu_custom_call.1']
    #allocation4 [shape = 's32[2]{0}', space=sflag, size = 0x8, scoped, tag = 'scoped memory for tpu_custom_call.1']
    #allocation5 [shape = 'u8[32768]{0}', space=vmem, size = 0x8000, scoped, tag = 'output window, operand 0']
    %10 = vsyncpa [#allocation3], 0
    %s11 = scalar_lea.sflag [#allocation3], 1
    %12 = vsyncpa %s11, 0
    %13 = vsyncpa [#allocation4], 0
    %s14 = scalar_lea.sflag [#allocation4], 1
    %15 = vsyncpa %s14, 0
    loop: start=0, step=1, limit=4
    $region2: #{tpu_custom_call.1} parent=1 // loop_pre_header
      _
    $region3: #{tpu_custom_call.1} parent=1 // loop_header
      %s17 = sphi 0, %s21
      %p18 = scmp.ge.s32.totalorder %s17, 4
      %s24 = sphi 0, %s36
      %s25 = sphi 0, %s32
      %s26 = sphi 0, %s24
      %s27 = sphi 0, %s25
      %s28 = sphi 0, %s26
      %s29 = sphi 0, %s27
      %s41 = sphi 0, %s43
      %s44 = sphi 0, %s41
      %s45 = sphi 0, %s44
      %s61 = sphi 0, %s45
      %s65 = sphi 0, %s65
      %s67 = sphi 0, %s65
      %s68 = sphi 0, %s67
      %s82 = sphi 0, %s68
      %s86 = sphi 0, %s86
      %s88 = sphi 0, %s86
      %s89 = sphi 0, %s88
      %s103 = sphi 0, %s89
      %s107 = sphi 0, %s107
      %s109 = sphi 0, %s107
      %s110 = sphi 0, %s109
      %s124 = sphi 0, %s110
      %s128 = sphi 0, %s128
      %s130 = sphi 0, %s128
      %s131 = sphi 0, %s130
      %s145 = sphi 0, %s131
      %s153 = sphi 0, %s155
      %s156 = sphi 0, %s153
      %s157 = sphi 0, %s156
      %s173 = sphi 0, %s157
    $region4: #{tpu_custom_call.1} parent=1 // loop_header_branch
      %20 = sbr.rel (%p18) target = $region8
    $region5: #{tpu_custom_call.1} parent=1 // loop_body
      %s22 = ssub.s32 %s17, 1
      %s23 = ssub.s32 %s17, 2
      %s30 = sadd.s32 1, %s25
      %p31 = scmp.ge.s32.totalorder %s30, 1
      %s32 = scalar_select %p31, 0, %s30
      %s33 = sadd.s32 1, %s24
      %s34 = scalar_select %p31, %s33, %s24
      %p35 = scmp.ge.s32.totalorder %s34, 2
      %s36 = scalar_select %p35, 0, %s34
      %s37 = ssub.s32 %s24, %s36
      %s38 = ssub.s32 %s25, %s32
      %s39 = sor.u32 %s37, %s38
      %p40 = scmp.eq.s32.totalorder %s39, 0
      %s42 = sadd.s32 %s41, 1
      %s43 = scalar_select %p40, %s41, %s42
      %p46 = pneg %p40
      %p47 = scmp.eq.s32.totalorder %s17, 1
      %p48 = por %p46, %p47
      %p49 = scmp.ne.s32.totalorder %s41, %s44
      %p50 = scmp.eq.s32.totalorder %s17, 0
      %p51 = por %p49, %p50
      %p52 = scmp.ne.s32.totalorder %s41, %s44
      %p53 = scmp.eq.s32.totalorder %s22, 1
      %p54 = por %p52, %p53
      %p55 = scmp.ne.s32.totalorder %s44, %s45
      %p56 = scmp.eq.s32.totalorder %s22, 0
      %p57 = por %p55, %p56
      %p58 = scmp.ne.s32.totalorder %s44, %s45
      %p59 = scmp.eq.s32.totalorder %s23, 1
      %p60 = por %p58, %p59
      %p62 = scmp.ne.s32.totalorder %s45, %s61
      %p63 = scmp.eq.s32.totalorder %s23, 0
      %p64 = por %p62, %p63
      %s66 = sadd.s32 %s65, 1
      %p69 = scmp.eq.s32.totalorder %s17, 1
      %p70 = scmp.ne.s32.totalorder %s65, %s67
      %p71 = scmp.eq.s32.totalorder %s17, 0
      %p72 = por %p70, %p71
      %p73 = scmp.ne.s32.totalorder %s65, %s67
      %p74 = scmp.eq.s32.totalorder %s22, 1
      %p75 = por %p73, %p74
      %p76 = scmp.ne.s32.totalorder %s67, %s68
      %p77 = scmp.eq.s32.totalorder %s22, 0
      %p78 = por %p76, %p77
      %p79 = scmp.ne.s32.totalorder %s67, %s68
      %p80 = scmp.eq.s32.totalorder %s23, 1
      %p81 = por %p79, %p80
      %p83 = scmp.ne.s32.totalorder %s68, %s82
      %p84 = scmp.eq.s32.totalorder %s23, 0
      %p85 = por %p83, %p84
      %s87 = sadd.s32 %s86, 1
      %p90 = scmp.eq.s32.totalorder %s17, 1
      %p91 = scmp.ne.s32.totalorder %s86, %s88
      %p92 = scmp.eq.s32.totalorder %s17, 0
      %p93 = por %p91, %p92
      %p94 = scmp.ne.s32.totalorder %s86, %s88
      %p95 = scmp.eq.s32.totalorder %s22, 1
      %p96 = por %p94, %p95
      %p97 = scmp.ne.s32.totalorder %s88, %s89
      %p98 = scmp.eq.s32.totalorder %s22, 0
      %p99 = por %p97, %p98
      %p100 = scmp.ne.s32.totalorder %s88, %s89
      %p101 = scmp.eq.s32.totalorder %s23, 1
      %p102 = por %p100, %p101
      %p104 = scmp.ne.s32.totalorder %s89, %s103
      %p105 = scmp.eq.s32.totalorder %s23, 0
      %p106 = por %p104, %p105
      %s108 = sadd.s32 %s107, 1
      %p111 = scmp.eq.s32.totalorder %s17, 1
      %p112 = scmp.ne.s32.totalorder %s107, %s109
      %p113 = scmp.eq.s32.totalorder %s17, 0
      %p114 = por %p112, %p113
      %p115 = scmp.ne.s32.totalorder %s107, %s109
      %p116 = scmp.eq.s32.totalorder %s22, 1
      %p117 = por %p115, %p116
      %p118 = scmp.ne.s32.totalorder %s109, %s110
      %p119 = scmp.eq.s32.totalorder %s22, 0
      %p120 = por %p118, %p119
      %p121 = scmp.ne.s32.totalorder %s109, %s110
      %p122 = scmp.eq.s32.totalorder %s23, 1
      %p123 = por %p121, %p122
      %p125 = scmp.ne.s32.totalorder %s110, %s124
      %p126 = scmp.eq.s32.totalorder %s23, 0
      %p127 = por %p125, %p126
      %s129 = sadd.s32 %s128, 1
      %p132 = scmp.eq.s32.totalorder %s17, 1
      %p133 = scmp.ne.s32.totalorder %s128, %s130
      %p134 = scmp.eq.s32.totalorder %s17, 0
      %p135 = por %p133, %p134
      %p136 = scmp.ne.s32.totalorder %s128, %s130
      %p137 = scmp.eq.s32.totalorder %s22, 1
      %p138 = por %p136, %p137
      %p139 = scmp.ne.s32.totalorder %s130, %s131
      %p140 = scmp.eq.s32.totalorder %s22, 0
      %p141 = por %p139, %p140
      %p142 = scmp.ne.s32.totalorder %s130, %s131
      %p143 = scmp.eq.s32.totalorder %s23, 1
      %p144 = por %p142, %p143
      %p146 = scmp.ne.s32.totalorder %s131, %s145
      %p147 = scmp.eq.s32.totalorder %s23, 0
      %p148 = por %p146, %p147
      %s149 = ssub.s32 %s24, %s36
      %s150 = ssub.s32 %s25, %s32
      %s151 = sor.u32 %s149, %s150
      %p152 = scmp.eq.s32.totalorder %s151, 0
      %s154 = sadd.s32 %s153, 1
      %s155 = scalar_select %p152, %s153, %s154
      %p158 = pneg %p152
      %p159 = scmp.eq.s32.totalorder %s17, 1
      %p160 = por %p158, %p159
      %p161 = scmp.ne.s32.totalorder %s153, %s156
      %p162 = scmp.eq.s32.totalorder %s17, 0
      %p163 = por %p161, %p162
      %p164 = scmp.ne.s32.totalorder %s153, %s156
      %p165 = scmp.eq.s32.totalorder %s22, 1
      %p166 = por %p164, %p165
      %p167 = scmp.ne.s32.totalorder %s156, %s157
      %p168 = scmp.eq.s32.totalorder %s22, 0
      %p169 = por %p167, %p168
      %p170 = scmp.ne.s32.totalorder %s156, %s157
      %p171 = scmp.eq.s32.totalorder %s23, 1
      %p172 = por %p170, %p171
      %p174 = scmp.ne.s32.totalorder %s157, %s173
      %p175 = scmp.eq.s32.totalorder %s23, 0
      %p176 = por %p174, %p175
      %p177 = scmp.le.s32.totalorder 1, %s17
      %p178 = scmp.lt.s32.totalorder %s17, 3
      %p179 = pnand %p177, %p178
      %p180 = pneg %p179
      // Predicated region
      $region9: #{tpu_custom_call.1} parent=5 // pred_check
        _
      $region10: #{tpu_custom_call.1} parent=5 // pred_check_branch
        %182 = sbr.rel (%p179) target = $region12
      $region11: #{tpu_custom_call.1} parent=5 // pred_region
        %s183 = ssub.s32 %s17, 1
        // Predicated region
        $region13: #{tpu_custom_call.1} parent=11 // pred_check
          %p184 = pneg %p78
        $region14: #{tpu_custom_call.1} parent=11 // pred_check_branch
          %186 = sbr.rel (%p184) target = $region16
        $region15: #{tpu_custom_call.1} parent=11 // pred_region
          _
        $region16: #{tpu_custom_call.1} parent=11 // pred_fallthru
          _
        // Predicated region
        $region17: #{tpu_custom_call.1} parent=11 // pred_check
          %p187 = pneg %p99
        $region18: #{tpu_custom_call.1} parent=11 // pred_check_branch
          %189 = sbr.rel (%p187) target = $region20
        $region19: #{tpu_custom_call.1} parent=11 // pred_region
          _
        $region20: #{tpu_custom_call.1} parent=11 // pred_fallthru
          _
        // Predicated region
        $region21: #{tpu_custom_call.1} parent=11 // pred_check
          %p190 = pneg %p120
        $region22: #{tpu_custom_call.1} parent=11 // pred_check_branch
          %192 = sbr.rel (%p190) target = $region24
        $region23: #{tpu_custom_call.1} parent=11 // pred_region
          _
        $region24: #{tpu_custom_call.1} parent=11 // pred_fallthru
          _
        // Predicated region
        $region25: #{tpu_custom_call.1} parent=11 // pred_check
          %p193 = pneg %p141
        $region26: #{tpu_custom_call.1} parent=11 // pred_check_branch
          %195 = sbr.rel (%p193) target = $region28
        $region27: #{tpu_custom_call.1} parent=11 // pred_region
          _
        $region28: #{tpu_custom_call.1} parent=11 // pred_fallthru
          _
      $region12: #{tpu_custom_call.1} parent=5 // pred_fallthru
        _
      %p196 = scmp.lt.s32.totalorder %s17, 2
      // Predicated region
      $region29: #{tpu_custom_call.1} parent=5 // pred_check
        %p197 = pneg %p196
      $region30: #{tpu_custom_call.1} parent=5 // pred_check_branch
        %199 = sbr.rel (%p197) target = $region32
      $region31: #{tpu_custom_call.1} parent=5 // pred_region
        // Predicated region
        $region33: #{tpu_custom_call.1} parent=31 // pred_check
          %p200 = pneg %p51
        $region34: #{tpu_custom_call.1} parent=31 // pred_check_branch
          %202 = sbr.rel (%p200) target = $region36
        $region35: #{tpu_custom_call.1} parent=31 // pred_region
          %s203 = sand.u32 %s41, 1
          %s204 = scalar_lea.sflag [#allocation3], %s203
          %s205 = sand.u32 %s41, 1
          %s206 = smul.addr %s205, 32
          %s207 = scalar_lea.vmem [#allocation2], %s206
          %s208 = smul.u32 2, %s25
          %s210 = ssub.s32 512, 512
          %211 = vsyncadd %s204, %s210
          %s212 = smul.addr %s24, 4
          %s213 = sadd.s32 %s208, %s212
          %s214 = smul.addr %s213, 128
          %s215 = scalar_lea.hbm %s0, %s214
          %s216 = sshll.u32 %s207, 4
          %s217 = int_to_ptr.vmem [resolvable:$true] %s216
          %222 = dma.hbm_to_vmem [thread:$0]  %s215, 512, %s217, %s204, 256, 256, 16
        $region36: #{tpu_custom_call.1} parent=31 // pred_fallthru
          _
      $region32: #{tpu_custom_call.1} parent=5 // pred_fallthru
        _
      %p223 = scmp.le.s32.totalorder 1, %s17
      %p224 = scmp.lt.s32.totalorder %s17, 3
      %p225 = pnand %p223, %p224
      %p226 = pneg %p225
      // Predicated region
      $region37: #{tpu_custom_call.1} parent=5 // pred_check
        _
      $region38: #{tpu_custom_call.1} parent=5 // pred_check_branch
        %228 = sbr.rel (%p225) target = $region40
      $region39: #{tpu_custom_call.1} parent=5 // pred_region
        %s229 = ssub.s32 %s17, 1
        %s230 = sand.u32 %s44, 1
        %s231 = scalar_lea.sflag [#allocation3], %s230
        %s232 = sand.u32 %s44, 1
        %s233 = smul.addr %s232, 32
        %s234 = scalar_lea.vmem [#allocation2], %s233
        // Predicated region
        $region41: #{tpu_custom_call.1} parent=39 // pred_check
          %p235 = pneg %p57
        $region42: #{tpu_custom_call.1} parent=39 // pred_check_branch
          %237 = sbr.rel (%p235) target = $region44
        $region43: #{tpu_custom_call.1} parent=39 // pred_region
          %238 = dma.done %s231, 512
        $region44: #{tpu_custom_call.1} parent=39 // pred_fallthru
          _
        %s239 = sand.u32 %s44, 1
        %s240 = scalar_lea.sflag [#allocation3], %s239
        %s241 = sand.u32 %s44, 1
        %s242 = smul.addr %s241, 32
        %s243 = scalar_lea.vmem [#allocation2], %s242
        %p244 = pneg %p57
        %p245 = pneg %p54
        %p246 = pneg %p78
        %p247 = pneg %p75
        %p248 = pneg %p99
        %p249 = pneg %p96
        %p250 = pneg %p120
        %p251 = pneg %p117
        %p252 = pneg %p141
        %p253 = pneg %p138
        %p254 = pneg %p169
        %p255 = pneg %p166
        %s256 = sand.u32 %s156, 1
        %s257 = scalar_lea.sflag [#allocation4], %s256
        %s258 = sand.u32 %s156, 1
        %s259 = smul.addr %s258, 32
        %s260 = scalar_lea.vmem [#allocation5], %s259
        %s261 = smul.u32 2, %s27
        %s262 = smul.u32 2, %s27
        %v264 = vld [vmem:[%s234] sm:$0xff]
        %v265 = vld [vmem:[%s234 + $0x8] sm:$0xff]
        %v266 = vld [vmem:[%s234 + $0x10] sm:$0xff]
        %v267 = vld [vmem:[%s234 + $0x18] sm:$0xff]
        %v268 = vpack.c.bf16 %v266, %v264
        %v269 = vpack.c.bf16 %v267, %v265
        %v270 = vld [vmem:[%s1] sm:$0xf]
        %v271 = vld [vmem:[%s2] sm:$0xff]
        %273 = vset.pattern.permute.xlu0 0
        %274 = vperm.xlu0 %273, %v271
        %v275 = vpop.permute.xlu0 %274
        %vm277 = vcmask 130048
        %v279 = vsel %vm277, %v270, 0
        %281 = vmatprep.subr.bf16.mxu0 0
        %282 = vmatpush1.bf16.msra.mxu0 0
        %283 = vmatprep.subr.bf16.mxu0 0
        %284 = vmatpush1.bf16.msra.mxu0 0
        %285 = vmatprep.subr.bf16.mxu0 0
        %286 = vmatpush1.bf16.msra.mxu0 0
        %287 = vmatprep.subr.bf16.mxu0 0
        %288 = vmatpush1.bf16.msra.mxu0 0
        %289 = vmatprep.subr.bf16.mxu0 0
        %290 = vmatpush1.bf16.msra.mxu0 0
        %291 = vmatprep.subr.bf16.mxu0 0
        %292 = vmatpush1.bf16.msra.mxu0 0
        %293 = vmatprep.subr.bf16.mxu0 0
        %294 = vmatpush1.bf16.msra.mxu0 0
        %295 = vmatprep.subr.bf16.mxu0 %v269
        %296 = vmatpush1.bf16.msra.mxu0 %v268
        %297 = vmatprep.subr.bf16.mxu0 0
        %298 = vmatpush2.bf16.msra.mxu0 0
        %299 = vmatprep.subr.bf16.mxu0 0
        %300 = vmatpush2.bf16.msra.mxu0 0
        %301 = vmatprep.subr.bf16.mxu0 0
        %302 = vmatpush2.bf16.msra.mxu0 0
        %303 = vmatprep.subr.bf16.mxu0 0
        %304 = vmatpush2.bf16.msra.mxu0 0
        %305 = vmatprep.subr.bf16.mxu0 0
        %306 = vmatpush2.bf16.msra.mxu0 0
        %307 = vmatprep.subr.bf16.mxu0 0
        %308 = vmatpush2.bf16.msra.mxu0 0
        %309 = vmatprep.subr.bf16.mxu0 0
        %310 = vmatpush2.bf16.msra.mxu0 0
        %311 = vmatprep.subr.bf16.mxu0 0
        %312 = vmatpush2.bf16.msra.mxu0 0
        %313 = vmatprep.mubr.bf16.mxu0 0
        %314 = vmatmul.mubr.bf16.gmra.mxu0 %v279
        %v315 = vpop.f32.mrf.mxu0
        %v316 = vadd.f32 %v275, %v315
        %v317 = vpop.f32.mrf.mxu0
        %v318 = vadd.f32 %v275, %v317
        %v319 = vpop.f32.mrf.mxu0
        %v320 = vpop.f32.mrf.mxu0
        %321 = vdwg.mxu0
        %v322 = vxor.u32 %v316, 2147483648
        %v323 = vxor.u32 %v318, 2147483648
        %v324 = vmul.f32 %v322, 1.442695
        %v325 = vpow.pop %v324
        %v326 = vmul.f32 %v323, 1.442695
        %v327 = vpow.pop %v326
        %v328 = vadd.f32 %v325, 1.0
        %v329 = vadd.f32 %v327, 1.0
        %v330 = vrcp.pop %v328
        %v331 = vmul.f32 1.0, %v330
        %v332 = vrcp.pop %v329
        %v333 = vmul.f32 1.0, %v332
        %v334 = vmul.f32 %v316, %v331
        %v335 = vmul.f32 %v318, %v333
        %v336 = vld [vmem:[%s3] sm:$0xf]
        %v337 = vld [vmem:[%s3 + $0x4] sm:$0xf]
        %v338 = vpack.c.bf16 %v334, %v334
        %v339 = vpack.c.bf16 %v335, %v335
        %v340 = vld [vmem:[%s4] sm:$0xff]
        %v341 = vld [vmem:[%s4 + $0x8] sm:$0xff]
        %343 = vset.pattern.permute.xlu0 0
        %344 = vperm.xlu0 %343, %v340
        %v345 = vpop.permute.xlu0 %344
        %348 = vset.pattern.permute.xlu0 0
        %349 = vperm.xlu0 %348, %v341
        %v350 = vpop.permute.xlu0 %349
        %v354 = vunpack.c.l.b16 %v336
        %v355 = vunpack.c.l.b16 %v337
        %v356 = vpack.c.b16 %v355, %v354
        %vm357 = vcmask 64512
        %v359 = vsel %vm357, %v356, 0
        %vm361 = vcmask 1043456
        %v363 = vsel %vm361, %v338, 0
        %v366 = vsel %vm361, %v339, 0
        %368 = vmatprep.subr.bf16.mxu0 0
        %369 = vmatpush1.bf16.msra.mxu0 0
        %370 = vmatprep.subr.bf16.mxu0 0
        %371 = vmatpush1.bf16.msra.mxu0 0
        %372 = vmatprep.subr.bf16.mxu0 0
        %373 = vmatpush1.bf16.msra.mxu0 0
        %374 = vmatprep.subr.bf16.mxu0 0
        %375 = vmatpush1.bf16.msra.mxu0 0
        %376 = vmatprep.subr.bf16.mxu0 0
        %377 = vmatpush1.bf16.msra.mxu0 0
        %378 = vmatprep.subr.bf16.mxu0 0
        %379 = vmatpush1.bf16.msra.mxu0 0
        %380 = vmatprep.subr.bf16.mxu0 0
        %381 = vmatpush1.bf16.msra.mxu0 0
        %382 = vmatprep.subr.bf16.mxu0 %v366
        %383 = vmatpush1.bf16.msra.mxu0 %v363
        %384 = vmatprep.subr.bf16.mxu0 0
        %385 = vmatpush2.bf16.msra.mxu0 0
        %386 = vmatprep.subr.bf16.mxu0 0
        %387 = vmatpush2.bf16.msra.mxu0 0
        %388 = vmatprep.subr.bf16.mxu0 0
        %389 = vmatpush2.bf16.msra.mxu0 0
        %390 = vmatprep.subr.bf16.mxu0 0
        %391 = vmatpush2.bf16.msra.mxu0 0
        %392 = vmatprep.subr.bf16.mxu0 0
        %393 = vmatpush2.bf16.msra.mxu0 0
        %394 = vmatprep.subr.bf16.mxu0 0
        %395 = vmatpush2.bf16.msra.mxu0 0
        %396 = vmatprep.subr.bf16.mxu0 0
        %397 = vmatpush2.bf16.msra.mxu0 0
        %398 = vmatprep.subr.bf16.mxu0 0
        %399 = vmatpush2.bf16.msra.mxu0 0
        %400 = vmatprep.mubr.bf16.mxu0 0
        %401 = vmatmul.mubr.bf16.gmra.mxu0 %v359
        %v402 = vpop.f32.mrf.mxu0
        %v403 = vadd.f32 %v345, %v402
        %v404 = vpop.f32.mrf.mxu0
        %v405 = vadd.f32 %v345, %v404
        %v406 = vpop.f32.mrf.mxu0
        %v407 = vadd.f32 %v350, %v406
        %v408 = vpop.f32.mrf.mxu0
        %v409 = vadd.f32 %v350, %v408
        %410 = vdwg.mxu0
        %v411 = vxor.u32 %v403, 2147483648
        %v412 = vxor.u32 %v405, 2147483648
        %v413 = vxor.u32 %v407, 2147483648
        %v414 = vxor.u32 %v409, 2147483648
        %v415 = vmul.f32 %v411, 1.442695
        %v416 = vpow.pop %v415
        %v417 = vmul.f32 %v412, 1.442695
        %v418 = vpow.pop %v417
        %v419 = vmul.f32 %v413, 1.442695
        %v420 = vpow.pop %v419
        %v421 = vmul.f32 %v414, 1.442695
        %v422 = vpow.pop %v421
        %v423 = vadd.f32 %v416, 1.0
        %v424 = vadd.f32 %v418, 1.0
        %v425 = vadd.f32 %v420, 1.0
        %v426 = vadd.f32 %v422, 1.0
        %v427 = vrcp.pop %v423
        %v428 = vmul.f32 1.0, %v427
        %v429 = vrcp.pop %v424
        %v430 = vmul.f32 1.0, %v429
        %v431 = vrcp.pop %v425
        %v432 = vmul.f32 1.0, %v431
        %v433 = vrcp.pop %v426
        %v434 = vmul.f32 1.0, %v433
        %v435 = vmul.f32 %v403, %v428
        %v436 = vmul.f32 %v405, %v430
        %v437 = vmul.f32 %v407, %v432
        %v438 = vmul.f32 %v409, %v434
        %v439 = vadd.f32 %v264, %v435
        %v440 = vadd.f32 %v265, %v436
        %v441 = vadd.f32 %v266, %v437
        %v442 = vadd.f32 %v267, %v438
        %443 = vst [vmem:[%s260] sm:$0xff] %v439
        %444 = vst [vmem:[%s260 + $0x8] sm:$0xff] %v440
        %445 = vst [vmem:[%s260 + $0x10] sm:$0xff] %v441
        %446 = vst [vmem:[%s260 + $0x18] sm:$0xff] %v442
        %s447 = sand.u32 %s156, 1
        %s448 = scalar_lea.sflag [#allocation4], %s447
        %s449 = sand.u32 %s156, 1
        %s450 = smul.addr %s449, 32
        %s451 = scalar_lea.vmem [#allocation5], %s450
        // Predicated region
        $region45: #{tpu_custom_call.1} parent=39 // pred_check
          %p452 = pneg %p166
        $region46: #{tpu_custom_call.1} parent=39 // pred_check_branch
          %454 = sbr.rel (%p452) target = $region48
        $region47: #{tpu_custom_call.1} parent=39 // pred_region
          %s455 = smul.u32 2, %s27
          %s457 = ssub.s32 512, 512
          %458 = vsyncadd %s448, %s457
          %s459 = smul.addr %s26, 4
          %s460 = sadd.s32 %s455, %s459
          %s461 = smul.addr %s460, 128
          %s462 = scalar_lea.hbm %s5, %s461
          %s463 = sshll.u32 %s451, 4
          %s464 = int_to_ptr.vmem [resolvable:$true] %s463
          %469 = dma.vmem_to_hbm [thread:$0]  %s464, 512, %s462, %s448, 256, 256, 16
        $region48: #{tpu_custom_call.1} parent=39 // pred_fallthru
          _
      $region40: #{tpu_custom_call.1} parent=5 // pred_fallthru
        _
      %p470 = scmp.le.s32.totalorder 2, %s17
      // Predicated region
      $region49: #{tpu_custom_call.1} parent=5 // pred_check
        %p471 = pneg %p470
      $region50: #{tpu_custom_call.1} parent=5 // pred_check_branch
        %473 = sbr.rel (%p471) target = $region52
      $region51: #{tpu_custom_call.1} parent=5 // pred_region
        %s474 = ssub.s32 %s17, 2
        // Predicated region
        $region53: #{tpu_custom_call.1} parent=51 // pred_check
          %p475 = pneg %p172
        $region54: #{tpu_custom_call.1} parent=51 // pred_check_branch
          %477 = sbr.rel (%p475) target = $region56
        $region55: #{tpu_custom_call.1} parent=51 // pred_region
          %s478 = sand.u32 %s157, 1
          %s479 = scalar_lea.sflag [#allocation4], %s478
          %s480 = sand.u32 %s157, 1
          %s481 = smul.addr %s480, 32
          %s482 = scalar_lea.vmem [#allocation5], %s481
          %483 = dma.done %s479, 512
        $region56: #{tpu_custom_call.1} parent=51 // pred_fallthru
          _
      $region52: #{tpu_custom_call.1} parent=5 // pred_fallthru
        _
    $region6: #{tpu_custom_call.1} parent=1 // loop_footer
      %s21 = sadd.s32 1, %s17
    $region7: #{tpu_custom_call.1} parent=1 // loop_footer_branch
      %16 = sbr.rel target = $region3
    $region8: #{tpu_custom_call.1} parent=1 // loop_exit
      _
    %484 = vsyncpa [#allocation3], 1
    %s485 = scalar_lea.sflag [#allocation3], 1
    %486 = vsyncpa %s485, 1
    %487 = vsyncpa [#allocation4], 1
    %s488 = scalar_lea.sflag [#allocation4], 1
    %489 = vsyncpa %s488, 1

</llo_original>
